<compile_context>
chip_gen: v7x
topology: tpu7x:2x2x1
jax: 0.10.0
libtpu: 0.0.40
codegen_flags: <defaults>
</compile_context>

<pallas_src>
import jax
import jax.numpy as jnp
from jax import lax
from jax.experimental import pallas as pl
from jax.experimental.pallas import tpu as pltpu


def _make_mask_kernel(mask_size: int, mask_len: int):
    N = mask_size
    L = mask_len          # number of masked tokens
    U = N - L             # number of unmasked tokens

    def kernel(krow_ref, kcol_ref, out_ref):
        kj = krow_ref[...]                                    # (1, N) key of token j
        ki = kcol_ref[...]                                    # (N, 1) key of token i

        idx_i = lax.broadcasted_iota(jnp.int32, (N, N), 0)    # i along sublanes
        idx_j = lax.broadcasted_iota(jnp.int32, (N, N), 1)    # j along lanes

        # token i strictly before token j in the random shuffle
        # (keys ascending, ties broken by index -> strict total order).
        before = (ki < kj) | ((ki == kj) & (idx_i < idx_j))   # (N, N) bool
        before_bf = before.astype(jnp.bfloat16)               # 0/1 -> exact in bf16

        ones_row = jnp.ones((1, N), jnp.bfloat16)
        ones_col = jnp.ones((N, 1), jnp.bfloat16)

        # rank of token j = #tokens before it            (MXU, exact f32 accum)
        rank_row = jnp.dot(ones_row, before_bf,
                           preferred_element_type=jnp.float32).astype(jnp.int32)   # (1, N)
        # #tokens after token i  -> masked flag of token i as a column
        after_col = jnp.dot(before_bf, ones_col,
                            preferred_element_type=jnp.float32).astype(jnp.int32)  # (N, 1)

        flag_row = rank_row < L                    # (1, N): token j is masked
        flag_col = after_col >= U                  # (N, 1): token i is masked
                                                   # (rank_i < L  <=>  after_i >= U)

        # inclusive prefix count of masked tokens: cm[i] = #{ j <= i : masked(j) }
        le = idx_j <= idx_i                                                        # (N, N)
        cm = jnp.dot((flag_row & le).astype(jnp.bfloat16), ones_col,
                     preferred_element_type=jnp.float32).astype(jnp.int32)         # (N, 1)

        # complement prefix count, algebraically (no extra NxN pass / reduce)
        pos_col = lax.broadcasted_iota(jnp.int32, (N, 1), 0)
        cu = (pos_col + 1) - cm                                                    # (N, 1)

        # output slot of token i in the fused [masked | unmasked] row:
        # masked   -> cm[i]-1        in [0, L)
        # unmasked -> L + cu[i]-1    in [L, N)
        slot = jnp.where(flag_col, cm - 1, L + (cu - 1))      # (N, 1), permutation of 0..N-1

        # single lane-dense emission pass: out[slot[i]] = i
        sel = slot == idx_j                                   # (N, N) one-hot per row
        out_ref[...] = jnp.sum(jnp.where(sel, idx_i, 0), axis=0, keepdims=True)

    return kernel


class MaskGenerator:
    """JAX/Pallas port of models/TSFormer/mask.py::MaskGenerator."""

    def __init__(self, mask_size: int, mask_ratio: float):
        self.mask_size = int(mask_size)
        self.mask_ratio = float(mask_ratio)
        self.mask_len = int(self.mask_size * self.mask_ratio)
        self.sort = True  # the kernel always emits sorted indices
        self._kernel = _make_mask_kernel(self.mask_size, self.mask_len)

        # Raise the scoped-VMEM limit only when the ~6 live NxN temporaries
        # would exceed the 32 MiB default; small sizes pass compiler_params=None.
        est_vmem = 6 * self.mask_size * self.mask_size * 4
        if est_vmem > 28 * 1024 * 1024:
            self._compiler_params = pltpu.CompilerParams(
                vmem_limit_bytes=int(min(est_vmem * 5 // 4, 120 * 1024 * 1024)))
        else:
            self._compiler_params = None

    def forward(self, rng_key):
        """rng_key: a jax.random PRNG key. Returns (unmasked_tokens, masked_tokens)."""
        N, L = self.mask_size, self.mask_len
        # Uniform random 32-bit keys -> sorting by them is a uniform shuffle
        # (ties broken by index inside the kernel).
        keys = jax.random.randint(rng_key, (N,),
                                  jnp.iinfo(jnp.int32).min,
                                  jnp.iinfo(jnp.int32).max,
                                  dtype=jnp.int32)
        out = pl.pallas_call(
            self._kernel,
            out_shape=jax.ShapeDtypeStruct((1, N), jnp.int32),
            compiler_params=self._compiler_params,
        )(keys.reshape(1, N), keys.reshape(N, 1))

        masked_tokens = out[0, :L]
        unmasked_tokens = out[0, L:]
        self.masked_tokens = masked_tokens
        self.unmasked_tokens = unmasked_tokens
        return unmasked_tokens, masked_tokens

    __call__ = forward


if __name__ == "__main__":
    # Small, deterministic example: mask_size=16 tokens, 75% masked.
    mask_size = 16
    mask_ratio = 0.75

    mg = MaskGenerator(mask_size, mask_ratio)
    unmasked_tokens, masked_tokens = mg(jax.random.PRNGKey(0))
    jax.block_until_ready((unmasked_tokens, masked_tokens))

    # Light sanity checks of the forward-pass semantics.
    m = list(map(int, masked_tokens))
    u = list(map(int, unmasked_tokens))
    assert len(m) == int(mask_size * mask_ratio)
    assert len(u) == mask_size - len(m)
    assert m == sorted(m) and u == sorted(u)
    assert sorted(m + u) == list(range(mask_size))

    print("KERNEL_OK")
</pallas_src>

<mosaic_0001>
module attributes {stable_mosaic.version = 11 : i64} {
  func.func @kernel(%arg0: memref<1x16xi32, #tpu.memory_space<vmem>>, %arg1: memref<16x1xi32, #tpu.memory_space<vmem>>, %arg2: memref<1x16xi32, #tpu.memory_space<vmem>>) attributes {dimension_semantics = [], scalar_prefetch = 0 : i64, scratch_operands = 0 : i64, tpu.core_type = #tpu.core_type<tc>} {
    %c0 = arith.constant 0 : index
    %c0_0 = arith.constant 0 : index
    %0 = vector.load %arg0[%c0, %c0_0] : memref<1x16xi32, #tpu.memory_space<vmem>>, vector<1x16xi32>
    %c0_1 = arith.constant 0 : index
    %c0_2 = arith.constant 0 : index
    %1 = vector.load %arg1[%c0_1, %c0_2] : memref<16x1xi32, #tpu.memory_space<vmem>>, vector<16x1xi32>
    %2 = tpu.iota {dimensions = array<i32: 0>} : vector<16x16xi32>
    %3 = tpu.iota {dimensions = array<i32: 1>} : vector<16x16xi32>
    %4 = vector.broadcast %1 : vector<16x1xi32> to vector<16x16xi32>
    %5 = vector.broadcast %0 : vector<1x16xi32> to vector<16x16xi32>
    %6 = arith.cmpi slt, %4, %5 : vector<16x16xi32>
    %7 = vector.broadcast %1 : vector<16x1xi32> to vector<16x16xi32>
    %8 = vector.broadcast %0 : vector<1x16xi32> to vector<16x16xi32>
    %9 = arith.cmpi eq, %7, %8 : vector<16x16xi32>
    %10 = arith.cmpi slt, %2, %3 : vector<16x16xi32>
    %11 = arith.andi %9, %10 : vector<16x16xi1>
    %12 = arith.ori %6, %11 : vector<16x16xi1>
    %13 = arith.extui %12 : vector<16x16xi1> to vector<16x16xi32>
    %14 = arith.sitofp %13 : vector<16x16xi32> to vector<16x16xf32>
    %15 = arith.truncf %14 : vector<16x16xf32> to vector<16x16xbf16>
    %cst = arith.constant 1.000000e+00 : bf16
    %16 = vector.broadcast %cst : bf16 to vector<1x16xbf16>
    %cst_3 = arith.constant 1.000000e+00 : bf16
    %17 = vector.broadcast %cst_3 : bf16 to vector<16x1xbf16>
    %cst_4 = arith.constant dense<0.000000e+00> : vector<1x16xf32>
    %18 = tpu.matmul %16, %15, %cst_4 {dimension_numbers = #tpu.dot_dimension_numbers<[1], [0], [0], [1], [0, 0, 1, 1], [], []>} : vector<1x16xbf16>, vector<16x16xbf16>, vector<1x16xf32> -> vector<1x16xf32>
    %19 = arith.fptosi %18 : vector<1x16xf32> to vector<1x16xi32>
    %cst_5 = arith.constant dense<0.000000e+00> : vector<16x1xf32>
    %20 = tpu.matmul %15, %17, %cst_5 {dimension_numbers = #tpu.dot_dimension_numbers<[1], [0], [0], [1], [0, 0, 1, 1], [], []>} : vector<16x16xbf16>, vector<16x1xbf16>, vector<16x1xf32> -> vector<16x1xf32>
    %21 = arith.fptosi %20 : vector<16x1xf32> to vector<16x1xi32>
    %c12_i32 = arith.constant 12 : i32
    %22 = vector.broadcast %c12_i32 : i32 to vector<1x16xi32>
    %23 = arith.cmpi slt, %19, %22 : vector<1x16xi32>
    %c4_i32 = arith.constant 4 : i32
    %24 = vector.broadcast %c4_i32 : i32 to vector<16x1xi32>
    %25 = arith.cmpi sge, %21, %24 : vector<16x1xi32>
    %26 = arith.cmpi sle, %3, %2 : vector<16x16xi32>
    %27 = vector.broadcast %23 : vector<1x16xi1> to vector<16x16xi1>
    %28 = arith.andi %27, %26 : vector<16x16xi1>
    %29 = arith.extui %28 : vector<16x16xi1> to vector<16x16xi32>
    %30 = arith.sitofp %29 : vector<16x16xi32> to vector<16x16xf32>
    %31 = arith.truncf %30 : vector<16x16xf32> to vector<16x16xbf16>
    %cst_6 = arith.constant dense<0.000000e+00> : vector<16x1xf32>
    %32 = tpu.matmul %31, %17, %cst_6 {dimension_numbers = #tpu.dot_dimension_numbers<[1], [0], [0], [1], [0, 0, 1, 1], [], []>} : vector<16x16xbf16>, vector<16x1xbf16>, vector<16x1xf32> -> vector<16x1xf32>
    %33 = arith.fptosi %32 : vector<16x1xf32> to vector<16x1xi32>
    %34 = tpu.iota {dimensions = array<i32: 0>} : vector<16x1xi32>
    %c1_i32 = arith.constant 1 : i32
    %35 = vector.broadcast %c1_i32 : i32 to vector<16x1xi32>
    %36 = arith.addi %34, %35 : vector<16x1xi32>
    %37 = arith.subi %36, %33 : vector<16x1xi32>
    %c1_i32_7 = arith.constant 1 : i32
    %38 = vector.broadcast %c1_i32_7 : i32 to vector<16x1xi32>
    %39 = arith.subi %33, %38 : vector<16x1xi32>
    %c1_i32_8 = arith.constant 1 : i32
    %40 = vector.broadcast %c1_i32_8 : i32 to vector<16x1xi32>
    %41 = arith.subi %37, %40 : vector<16x1xi32>
    %c12_i32_9 = arith.constant 12 : i32
    %42 = vector.broadcast %c12_i32_9 : i32 to vector<16x1xi32>
    %43 = arith.addi %42, %41 : vector<16x1xi32>
    %44 = arith.select %25, %39, %43 : vector<16x1xi1>, vector<16x1xi32>
    %45 = vector.broadcast %44 : vector<16x1xi32> to vector<16x16xi32>
    %46 = arith.cmpi eq, %45, %3 : vector<16x16xi32>
    %c0_i32 = arith.constant 0 : i32
    %47 = vector.broadcast %c0_i32 : i32 to vector<16x16xi32>
    %48 = arith.select %46, %2, %47 : vector<16x16xi1>, vector<16x16xi32>
    %cst_10 = arith.constant dense<0> : vector<16xi32>
    %49 = vector.multi_reduction <add>, %48, %cst_10 [0] : vector<16x16xi32> to vector<16xi32>
    %50 = vector.shape_cast %49 : vector<16xi32> to vector<1x16xi32>
    %c0_11 = arith.constant 0 : index
    %c0_12 = arith.constant 0 : index
    %51 = vector.load %arg2[%c0_11, %c0_12] : memref<1x16xi32, #tpu.memory_space<vmem>>, vector<1x16xi32>
    tpu.vector_store %arg2[%c0_11, %c0_12], %50 {strides = array<i32>} : memref<1x16xi32, #tpu.memory_space<vmem>>, vector<1x16xi32>,
    return
  }
}

</mosaic_0001>

<llo_original>
// kernel: tpu_custom_call.1
$region0: #{tpu_custom_call.1}
  #allocation0 [shape = 'u32[]', space=smem, size = 0x4, offset = 0x4, fixed_abs, tag = 'smem constant byte address 0x4 - core index']
  #allocation1 [shape = 'u32[144,128]{1,0:T(1,128)}', space=vmem, size = 0x12000, scoped, tag = 'internal scratch']
  %s0 = inlined_call_operand.vmem [shape: s32[1,16], index: 0, kind: input, shape index: {}]
  %s1 = inlined_call_operand.vmem [shape: s32[16,1], index: 1, kind: input, shape index: {}]
  %s2 = inlined_call_operand.hbm [shape: s32[1,16], index: 2, kind: output, shape index: {}]
  %s3 = sld [smem:[#allocation0]]
  $region18: #{tpu_custom_call.1} parent=0
    _
  %s5 = ssub.s32 1, %s3
  %s6 = scalar_select 0, %s5, %s3
  $region1: #{tpu_custom_call.1} parent=0
    #allocation2 [shape = 'u8[512]{0}', space=vmem, size = 0x400, scoped, tag = 'output window, operand 0, single buffered']
    #allocation3 [shape = 's32[1]{0}', space=sflag, size = 0x4, scoped, tag = 'scoped memory for tpu_custom_call.1']
    %7 = vsyncpa [#allocation3], 0
    // Predicated region
    $region2: #{tpu_custom_call.1} parent=1 // pred_check
      _
    $region3: #{tpu_custom_call.1} parent=1 // pred_check_branch
      %9 = sbr.rel (0) target = $region5
    $region4: #{tpu_custom_call.1} parent=1 // pred_region
      _
    $region5: #{tpu_custom_call.1} parent=1 // pred_fallthru
      _
    // Predicated region
    $region6: #{tpu_custom_call.1} parent=1 // pred_check
      _
    $region7: #{tpu_custom_call.1} parent=1 // pred_check_branch
      %11 = sbr.rel (0) target = $region9
    $region8: #{tpu_custom_call.1} parent=1 // pred_region
      _
    $region9: #{tpu_custom_call.1} parent=1 // pred_fallthru
      _
    %v14 = vld [vmem:[%s0] sm:$0x1]
    %v15 = vld [vmem:[%s1] sm:$0xff]
    %v16 = vld [vmem:[%s1 + $0x8] sm:$0xff]
    %v17 = vlaneseq
    %v18 = vshrl.u32 %v17, 7
    %v19 = vadd.s32 %v18, 8
    %v20 = vlaneseq
    %v21 = vand.u32 %v20, 127
    %22 = vset.pattern.permute.xlu0 0
    %23 = vperm.xlu0 %22, %v15
    %v24 = vpop.permute.xlu0 %23
    %25 = vset.pattern.permute.xlu0 0
    %26 = vperm.xlu0 %25, %v16
    %v27 = vpop.permute.xlu0 %26
    %v28 = vlaneseq
    %v29 = vshrl.u32 %v28, 7
    %v30 = vsub.s32 0, %v29
    %v31 = vrot.slane %v14, %v30
    %vm32 = vcmp.lt.s32.totalorder %v24, %v31
    %vm33 = vcmp.lt.s32.totalorder %v27, %v31
    %vm34 = vcmp.eq.s32.totalorder %v24, %v31
    %vm35 = vcmp.eq.s32.totalorder %v27, %v31
    %vm36 = vcmp.lt.s32.totalorder %v18, %v21
    %vm37 = vcmp.lt.s32.totalorder %v19, %v21
    %vm38 = vmand %vm34, %vm36
    %vm39 = vmand %vm35, %vm37
    %vm40 = vmor %vm32, %vm38
    %vm41 = vmor %vm33, %vm39
    %v42 = vsel %vm40, 1, 0
    %v43 = vsel %vm41, 1, 0
    %v44 = vcvt.s32.f32 %v42
    %v45 = vcvt.s32.f32 %v43
    %v46 = vpack.c.bf16 %v45, %v44
    %vm47 = vcmask 130048
    %v49 = vsel %vm47, 1065369472, 0
    %51 = vmatprep.subr.bf16.mxu0 0
    %52 = vmatpush1.bf16.msra.mxu0 %v46
    %53 = vmatprep.subr.bf16.mxu0 0
    %54 = vmatpush1.bf16.msra.mxu0 0
    %55 = vmatprep.subr.bf16.mxu0 0
    %56 = vmatpush1.bf16.msra.mxu0 0
    %57 = vmatprep.subr.bf16.mxu0 0
    %58 = vmatpush1.bf16.msra.mxu0 0
    %59 = vmatprep.subr.bf16.mxu0 0
    %60 = vmatpush1.bf16.msra.mxu0 0
    %61 = vmatprep.subr.bf16.mxu0 0
    %62 = vmatpush1.bf16.msra.mxu0 0
    %63 = vmatprep.subr.bf16.mxu0 0
    %64 = vmatpush1.bf16.msra.mxu0 0
    %65 = vmatprep.subr.bf16.mxu0 0
    %66 = vmatpush1.bf16.msra.mxu0 0
    %67 = vmatprep.subr.bf16.mxu0 0
    %68 = vmatpush1.bf16.msra.mxu0 0
    %69 = vmatprep.subr.bf16.mxu0 0
    %70 = vmatpush1.bf16.msra.mxu0 0
    %71 = vmatprep.subr.bf16.mxu0 0
    %72 = vmatpush1.bf16.msra.mxu0 0
    %73 = vmatprep.subr.bf16.mxu0 0
    %74 = vmatpush1.bf16.msra.mxu0 0
    %75 = vmatprep.subr.bf16.mxu0 0
    %76 = vmatpush1.bf16.msra.mxu0 0
    %77 = vmatprep.subr.bf16.mxu0 0
    %78 = vmatpush1.bf16.msra.mxu0 0
    %79 = vmatprep.subr.bf16.mxu0 0
    %80 = vmatpush1.bf16.msra.mxu0 0
    %81 = vmatprep.subr.bf16.mxu0 0
    %82 = vmatpush1.bf16.msra.mxu0 0
    %83 = vmatprep.mubr.bf16.mxu0 0
    %84 = vmatmul.mubr.bf16.gmra.mrb[0].mxu0 %v49
    %v85 = vpop.f32.mrb[0].mxu0
    %v86 = vadd.f32 0.0, %v85
    %v87 = vpop.f32.mrb[0].mxu0
    %v88 = vpop.f32.mrb[0].mxu0
    %v89 = vpop.f32.mrb[0].mxu0
    %90 = vdwg.mxu0
    %v91 = vcvt.f32.s32.to.zero.pseudo %v86
    %v93 = vsel %vm47, %v46, 0
    %95 = vmatprep.subr.bf16.mxu0 0
    %96 = vmatpush1.bf16.msra.mxu0 1065369472
    %97 = vmatprep.subr.bf16.mxu0 0
    %98 = vmatpush1.bf16.msra.mxu0 0
    %99 = vmatprep.subr.bf16.mxu0 0
    %100 = vmatpush1.bf16.msra.mxu0 0
    %101 = vmatprep.subr.bf16.mxu0 0
    %102 = vmatpush1.bf16.msra.mxu0 0
    %103 = vmatprep.subr.bf16.mxu0 0
    %104 = vmatpush1.bf16.msra.mxu0 0
    %105 = vmatprep.subr.bf16.mxu0 0
    %106 = vmatpush1.bf16.msra.mxu0 0
    %107 = vmatprep.subr.bf16.mxu0 0
    %108 = vmatpush1.bf16.msra.mxu0 0
    %109 = vmatprep.subr.bf16.mxu0 0
    %110 = vmatpush1.bf16.msra.mxu0 0
    %111 = vmatprep.subr.bf16.mxu0 0
    %112 = vmatpush1.bf16.msra.mxu0 0
    %113 = vmatprep.subr.bf16.mxu0 0
    %114 = vmatpush1.bf16.msra.mxu0 0
    %115 = vmatprep.subr.bf16.mxu0 0
    %116 = vmatpush1.bf16.msra.mxu0 0
    %117 = vmatprep.subr.bf16.mxu0 0
    %118 = vmatpush1.bf16.msra.mxu0 0
    %119 = vmatprep.subr.bf16.mxu0 0
    %120 = vmatpush1.bf16.msra.mxu0 0
    %121 = vmatprep.subr.bf16.mxu0 0
    %122 = vmatpush1.bf16.msra.mxu0 0
    %123 = vmatprep.subr.bf16.mxu0 0
    %124 = vmatpush1.bf16.msra.mxu0 0
    %125 = vmatprep.subr.bf16.mxu0 0
    %126 = vmatpush1.bf16.msra.mxu0 0
    %127 = vmatprep.mubr.bf16.mxu0 0
    %128 = vmatmul.mubr.bf16.gmra.mrb[0].mxu0 %v93
    %v129 = vpop.f32.mrb[0].mxu0
    %v130 = vadd.f32 0.0, %v129
    %v131 = vpop.f32.mrb[0].mxu0
    %v132 = vpop.f32.mrb[0].mxu0
    %v133 = vadd.f32 0.0, %v132
    %v134 = vpop.f32.mrb[0].mxu0
    %135 = vdwg.mxu0
    %v136 = vcvt.f32.s32.to.zero.pseudo %v130
    %v137 = vcvt.f32.s32.to.zero.pseudo %v133
    %vm138 = vcmp.lt.s32.totalorder %v91, 12
    %vm139 = vcmp.ge.s32.totalorder %v136, 4
    %vm140 = vcmp.ge.s32.totalorder %v137, 4
    %vm141 = vcmp.le.s32.totalorder %v21, %v18
    %vm142 = vcmp.le.s32.totalorder %v21, %v19
    %v143 = vsel %vm138, 1, 0
    %v144 = vlaneseq
    %v145 = vshrl.u32 %v144, 7
    %v146 = vsub.s32 0, %v145
    %v147 = vrot.slane %v143, %v146
    %vm148 = vcmp.eq.s32.totalorder %v147, 1
    %vm149 = vmand %vm148, %vm141
    %vm150 = vmand %vm148, %vm142
    %v151 = vsel %vm149, 1, 0
    %v152 = vsel %vm150, 1, 0
    %v153 = vcvt.s32.f32 %v151
    %v154 = vcvt.s32.f32 %v152
    %v155 = vpack.c.bf16 %v154, %v153
    %v157 = vsel %vm47, %v155, 0
    %159 = vmatprep.subr.bf16.mxu0 0
    %160 = vmatpush1.bf16.msra.mxu0 1065369472
    %161 = vmatprep.subr.bf16.mxu0 0
    %162 = vmatpush1.bf16.msra.mxu0 0
    %163 = vmatprep.subr.bf16.mxu0 0
    %164 = vmatpush1.bf16.msra.mxu0 0
    %165 = vmatprep.subr.bf16.mxu0 0
    %166 = vmatpush1.bf16.msra.mxu0 0
    %167 = vmatprep.subr.bf16.mxu0 0
    %168 = vmatpush1.bf16.msra.mxu0 0
    %169 = vmatprep.subr.bf16.mxu0 0
    %170 = vmatpush1.bf16.msra.mxu0 0
    %171 = vmatprep.subr.bf16.mxu0 0
    %172 = vmatpush1.bf16.msra.mxu0 0
    %173 = vmatprep.subr.bf16.mxu0 0
    %174 = vmatpush1.bf16.msra.mxu0 0
    %175 = vmatprep.subr.bf16.mxu0 0
    %176 = vmatpush1.bf16.msra.mxu0 0
    %177 = vmatprep.subr.bf16.mxu0 0
    %178 = vmatpush1.bf16.msra.mxu0 0
    %179 = vmatprep.subr.bf16.mxu0 0
    %180 = vmatpush1.bf16.msra.mxu0 0
    %181 = vmatprep.subr.bf16.mxu0 0
    %182 = vmatpush1.bf16.msra.mxu0 0
    %183 = vmatprep.subr.bf16.mxu0 0
    %184 = vmatpush1.bf16.msra.mxu0 0
    %185 = vmatprep.subr.bf16.mxu0 0
    %186 = vmatpush1.bf16.msra.mxu0 0
    %187 = vmatprep.subr.bf16.mxu0 0
    %188 = vmatpush1.bf16.msra.mxu0 0
    %189 = vmatprep.subr.bf16.mxu0 0
    %190 = vmatpush1.bf16.msra.mxu0 0
    %191 = vmatprep.mubr.bf16.mxu0 0
    %192 = vmatmul.mubr.bf16.gmra.mrb[0].mxu0 %v157
    %v193 = vpop.f32.mrb[0].mxu0
    %v194 = vadd.f32 0.0, %v193
    %v195 = vpop.f32.mrb[0].mxu0
    %v196 = vpop.f32.mrb[0].mxu0
    %v197 = vadd.f32 0.0, %v196
    %v198 = vpop.f32.mrb[0].mxu0
    %199 = vdwg.mxu0
    %v200 = vcvt.f32.s32.to.zero.pseudo %v194
    %v201 = vcvt.f32.s32.to.zero.pseudo %v197
    %v202 = vadd.s32 %v18, 1
    %v203 = vadd.s32 %v19, 1
    %v204 = vsub.s32 %v202, %v200
    %v205 = vsub.s32 %v203, %v201
    %v206 = vsub.s32 %v200, 1
    %v207 = vsub.s32 %v201, 1
    %v208 = vsub.s32 %v204, 1
    %v209 = vsub.s32 %v205, 1
    %v210 = vadd.s32 %v208, 12
    %v211 = vadd.s32 %v209, 12
    %v212 = vsel %vm139, %v206, %v210
    %v213 = vsel %vm140, %v207, %v211
    %214 = vset.pattern.permute.xlu0 0
    %215 = vperm.xlu0 %214, %v212
    %v216 = vpop.permute.xlu0 %215
    %217 = vset.pattern.permute.xlu0 0
    %218 = vperm.xlu0 %217, %v213
    %v219 = vpop.permute.xlu0 %218
    %vm220 = vcmp.eq.s32.totalorder %v216, %v21
    %vm221 = vcmp.eq.s32.totalorder %v219, %v21
    %v222 = vsel %vm220, %v18, 0
    %v223 = vsel %vm221, %v19, 0
    %v224 = vsel %vm47, %v222, 0
    %v225 = vsel %vm47, %v223, 0
    %v226 = vadd.s32 %v224, %v225
    %v227 = vrot.slane %v226, 4
    %v228 = vadd.s32 %v226, %v227
    %v229 = vrot.slane %v228, 2
    %v230 = vadd.s32 %v228, %v229
    %v231 = vrot.slane %v230, 1
    %v232 = vadd.s32 %v230, %v231
    %vm233 = vcmask 122880
    %234 = vst.msk [vmem:[#allocation2] sm:$0x1] %vm233, %v232
    // Predicated region
    $region10: #{tpu_custom_call.1} parent=1 // pred_check
      _
    $region11: #{tpu_custom_call.1} parent=1 // pred_check_branch
      %236 = sbr.rel (0) target = $region13
    $region12: #{tpu_custom_call.1} parent=1 // pred_region
      %s238 = ssub.s32 16, 16
      %239 = vsyncadd [#allocation3], %s238
      %s241 = sshll.u32 [#allocation2], 4
      %s242 = int_to_ptr.vmem [resolvable:$true] %s241
      %244 = dma.vmem_to_hbm [thread:$0]  %s242, 16, %s2, [#allocation3]
    $region13: #{tpu_custom_call.1} parent=1 // pred_fallthru
      _
    // Predicated region
    $region14: #{tpu_custom_call.1} parent=1 // pred_check
      _
    $region15: #{tpu_custom_call.1} parent=1 // pred_check_branch
      %246 = sbr.rel (0) target = $region17
    $region16: #{tpu_custom_call.1} parent=1 // pred_region
      %247 = dma.done [#allocation3], 16
    $region17: #{tpu_custom_call.1} parent=1 // pred_fallthru
      _
    %248 = vsyncpa [#allocation3], 1

</llo_original>
